<compile_context>
chip_gen: v5e
topology: v5e:2x2
jax: 0.10.0
libtpu: 0.0.40
codegen_flags: <defaults>
</compile_context>

<pallas_src>
import jax
import jax.numpy as jnp
from jax import lax
from jax.experimental import pallas as pl
from jax.experimental.pallas import tpu as pltpu

# ----------------------- small, forward-consistent dims ---------------------
B, N = 2, 4                 # batch, clips per sample
C, T, H, W = 4, 4, 8, 8     # video clip dims (NCTHW per clip)
THW = T * H * W             # 256
R = B * N                   # rows through encoder / projector (8)
FEATURE = 128               # feature_size
PROJ = 256                  # projection_size
PROJ_HID = 256              # projection_hidden_size
PRED_HID = 128              # pred_hidden_size
MSE_L, LOOP_L, STD_L, COV_L = 1.0, 1.0, 1.0, 0.04
BN_EPS = 1e-5

# ------------------ packed bf16 weight slab: row offsets --------------------
PW1_OFF = 0                           # (FEATURE,  PROJ_HID)
PW2_OFF = PW1_OFF + FEATURE           # (PROJ_HID, PROJ)
QW1T_OFF = PW2_OFF + PROJ_HID         # (PRED_HID, PROJ)  == pred.w1.T
QW2_OFF = QW1T_OFF + PRED_HID         # (PRED_HID, PROJ)
W_ROWS = QW2_OFF + PRED_HID           # 640

# ------------------ packed f32 small-vector slab: row indices ---------------
ENC_W_ROW = 0                         # rows 0..C-1, cols :FEATURE
ENC_B_ROW = C                         # row 4, cols :FEATURE
PB1_ROW, PG_ROW, PBE_ROW, PB2_ROW = 5, 6, 7, 8
QB1_ROW, QG_ROW, QBE_ROW = 9, 10, 11  # cols :PRED_HID
QB2_ROW = 12
VEC_ROWS = 16

# ------------------------------ cost estimate --------------------------------
_FLOPS = 2 * R * (FEATURE * PROJ_HID + PROJ_HID * PROJ + PROJ * PRED_HID
                  + PRED_HID * PROJ + 2 * R * PROJ) + R * C * THW
_TRANS = PROJ_HID + PRED_HID + PROJ                     # rsqrt / sqrt lanes
_BYTES = R * C * THW * 4 + W_ROWS * PROJ * 2 + VEC_ROWS * PROJ * 4 + 4


def _vmem():
    return pl.BlockSpec(memory_space=pltpu.MemorySpace.VMEM)


def _smem():
    return pl.BlockSpec(memory_space=pltpu.MemorySpace.SMEM)


# ------------------------------ fused kernel ---------------------------------
def pcnet_kernel(x_ref, w_ref, v_ref, o_ref):
    """Whole PCNET forward: encoder -> projector -> predictor -> scalar loss."""
    f32 = jnp.float32

    def vrow(r, width=PROJ):                 # (1, width) f32 bias/gamma/beta row
        return v_ref[r:r + 1, 0:width]

    def wmat(off, rows):                     # bf16 weight slice -> f32 (VPU cast)
        return w_ref[off:off + rows, :].astype(f32)

    # --- encoder: in-kernel mean-pool (4 lane-segment reduces) + rank-1 apply
    xx = x_ref[...]                                              # (R, C*THW)
    hidden = jnp.zeros((R, FEATURE), f32) + vrow(ENC_B_ROW, FEATURE)
    inv_thw = 1.0 / THW
    for c in range(C):                                           # unrolled, C=4
        seg = xx[:, c * THW:(c + 1) * THW]                       # lane-aligned
        pooled_c = jnp.sum(seg, axis=-1, keepdims=True) * inv_thw      # (R, 1)
        hidden = hidden + pooled_c * vrow(ENC_W_ROW + c, FEATURE)      # (R, 128)

    # --- shared Linear -> BatchNorm1d(train stats) -> ReLU body --------------
    def bn_relu(z, g, be, row_mask=None, count=None):
        if row_mask is None:
            mu = jnp.mean(z, axis=0, keepdims=True)
            var = jnp.mean((z - mu) ** 2, axis=0, keepdims=True)        # biased
        else:
            inv = 1.0 / count
            mu = jnp.sum(z * row_mask, axis=0, keepdims=True) * inv
            var = jnp.sum(((z - mu) ** 2) * row_mask, axis=0, keepdims=True) * inv
        zn = (z - mu) * lax.rsqrt(var + BN_EPS) * g + be
        return jnp.maximum(zn, 0.0)

    # --- projector MLP -> gt_z ------------------------------------------------
    z1 = jnp.dot(hidden, wmat(PW1_OFF, FEATURE),
                 preferred_element_type=f32) + vrow(PB1_ROW)
    a1 = bn_relu(z1, vrow(PG_ROW), vrow(PBE_ROW))
    gt_z = jnp.dot(a1, wmat(PW2_OFF, PROJ_HID),
                   preferred_element_type=f32) + vrow(PB2_ROW)          # (R, PROJ)

    # --- clip-neighbour structure generated in-kernel (no extra operands) -----
    ri = lax.broadcasted_iota(jnp.int32, (R, R), 0)
    ci = lax.broadcasted_iota(jnp.int32, (R, R), 1)
    row_is_last_clip = (ri == (N - 1))
    for b in range(1, B):                                        # unrolled, B=2
        row_is_last_clip = row_is_last_clip | (ri == (b * N + N - 1))
    shift_sel = jnp.where((ci == ri + 1) & jnp.logical_not(row_is_last_clip),
                          1.0, 0.0).astype(f32)                  # (R, R)
    valid = jnp.sum(shift_sel, axis=1, keepdims=True)            # (R, 1) row mask
    gt_next = jnp.dot(shift_sel, gt_z,
                      preferred_element_type=f32)                # rows w/o next -> 0

    # --- predictor Res_MLP on all R rows, BN stats masked to the valid rows ---
    n_valid = float(B * (N - 1))
    z2 = lax.dot_general(gt_z, wmat(QW1T_OFF, PRED_HID),         # qw1 stored .T
                         dimension_numbers=(((1,), (1,)), ((), ())),
                         preferred_element_type=f32) + vrow(QB1_ROW, PRED_HID)
    a2 = bn_relu(z2, vrow(QG_ROW, PRED_HID), vrow(QBE_ROW, PRED_HID),
                 row_mask=valid, count=n_valid)
    pred_z = (jnp.dot(a2, wmat(QW2_OFF, PRED_HID), preferred_element_type=f32)
              + vrow(QB2_ROW) + gt_z)                            # residual (Res_MLP)

    # --- losses ----------------------------------------------------------------
    diff = (pred_z - gt_next) * valid
    pred_loss = jnp.sum(diff * diff) * (1.0 / (n_valid * PROJ))  # mse_loss

    # VICReg std / cov on gt_z (FullGatherLayer == identity, world_size == 1)
    zc = gt_z - jnp.mean(gt_z, axis=0, keepdims=True)
    var = jnp.sum(zc * zc, axis=0, keepdims=True) * (1.0 / (R - 1))     # (1, PROJ)
    std = jnp.sqrt(var + 1e-4)
    std_loss = jnp.mean(jnp.maximum(1.0 - std, 0.0))

    # Gram trick, transpose-free: ||zc^T zc||_F^2 == ||zc zc^T||_F^2
    gram = lax.dot_general(zc, zc, dimension_numbers=(((1,), (1,)), ((), ())),
                           preferred_element_type=f32)           # (R, R)
    sum_cov_sq = jnp.sum(gram * gram) * (1.0 / ((R - 1) * (R - 1)))
    cov_loss = (sum_cov_sq - jnp.sum(var * var)) * (1.0 / PROJ)  # off-diagonal only

    loop_loss = 0.0   # closed_loop=False, sym_loss=False (module defaults)
    o_ref[0, 0] = (pred_loss * MSE_L + loop_loss * LOOP_L
                   + std_loss * STD_L + cov_loss * COV_L)


# ------------------------------ pallas wrapper --------------------------------
@jax.jit
def pcnet_forward(x, w_slab, vec_slab):
    b, n, c, t, h, w = x.shape
    x_flat = x.reshape(b * n, c * t * h * w)          # free, lane-dense reshape
    out = pl.pallas_call(
        pcnet_kernel,
        out_shape=jax.ShapeDtypeStruct((1, 1), jnp.float32),
        in_specs=[_vmem()] * 3,
        out_specs=_smem(),
        cost_estimate=pl.CostEstimate(flops=_FLOPS, transcendentals=_TRANS,
                                      bytes_accessed=_BYTES),
    )(x_flat, w_slab, vec_slab)
    return out[0, 0]


# ------------------------------- parameters -----------------------------------
def init_params(key):
    ks = jax.random.split(key, 14)
    bf16, f32 = jnp.bfloat16, jnp.float32

    def lin(k, fi, fo):
        return jax.random.normal(k, (fi, fo), f32) / jnp.sqrt(jnp.float32(fi))

    def vec(k, nn, scale=0.1):
        return scale * jax.random.normal(k, (1, nn), f32)

    enc_w = lin(ks[0], C, FEATURE)                      # tiny, kept f32
    enc_b = vec(ks[1], FEATURE)
    proj = dict(
        w1=lin(ks[2], FEATURE, PROJ_HID).astype(bf16),  # big weights stored bf16
        b1=vec(ks[3], PROJ_HID),
        gamma=1.0 + vec(ks[4], PROJ_HID), beta=vec(ks[5], PROJ_HID),
        w2=lin(ks[6], PROJ_HID, PROJ).astype(bf16), b2=vec(ks[7], PROJ))
    pred = dict(
        w1=lin(ks[8], PROJ, PRED_HID).astype(bf16),
        b1=vec(ks[9], PRED_HID),
        gamma=1.0 + vec(ks[10], PRED_HID), beta=vec(ks[11], PRED_HID),
        w2=lin(ks[12], PRED_HID, PROJ).astype(bf16), b2=vec(ks[13], PROJ))
    return dict(enc_w=enc_w, enc_b=enc_b, proj=proj, pred=pred)


def pack_params(params):
    """Pack parameters into the two kernel operands (bf16 weight slab + f32 vec slab)."""
    pj, pd = params["proj"], params["pred"]
    w_slab = jnp.concatenate([
        pj["w1"],            # rows   0:128  (FEATURE,  PROJ_HID)
        pj["w2"],            # rows 128:384  (PROJ_HID, PROJ)
        pd["w1"].T,          # rows 384:512  (PRED_HID, PROJ)   stored transposed
        pd["w2"],            # rows 512:640  (PRED_HID, PROJ)
    ], axis=0)                                          # (640, 256) bf16

    v = jnp.zeros((VEC_ROWS, PROJ), jnp.float32)
    v = v.at[ENC_W_ROW:ENC_W_ROW + C, 0:FEATURE].set(params["enc_w"])
    v = v.at[ENC_B_ROW, 0:FEATURE].set(params["enc_b"][0])
    v = v.at[PB1_ROW, :].set(pj["b1"][0])
    v = v.at[PG_ROW, :].set(pj["gamma"][0])
    v = v.at[PBE_ROW, :].set(pj["beta"][0])
    v = v.at[PB2_ROW, :].set(pj["b2"][0])
    v = v.at[QB1_ROW, 0:PRED_HID].set(pd["b1"][0])
    v = v.at[QG_ROW, 0:PRED_HID].set(pd["gamma"][0])
    v = v.at[QBE_ROW, 0:PRED_HID].set(pd["beta"][0])
    v = v.at[QB2_ROW, :].set(pd["b2"][0])
    return w_slab, v


# --------------------------- pure-JAX reference --------------------------------
def ref_forward(x, params):
    f32 = jnp.float32
    b, n, c, t, h, w = x.shape
    pooled = x.reshape(b * n, c, -1).mean(-1)
    hidden = pooled @ params["enc_w"] + params["enc_b"]

    def mlp(xx, p, residual):
        z = xx @ p["w1"].astype(f32) + p["b1"]
        mu = z.mean(0, keepdims=True)
        var = ((z - mu) ** 2).mean(0, keepdims=True)
        a = jnp.maximum(
            (z - mu) / jnp.sqrt(var + BN_EPS) * p["gamma"] + p["beta"], 0.0)
        out = a @ p["w2"].astype(f32) + p["b2"]
        return out + xx if residual else out

    gt_z = mlp(hidden, params["proj"], False)
    gt3 = gt_z.reshape(b, n, -1)
    pred_z = mlp(gt3[:, :-1].reshape(b * (n - 1), -1), params["pred"], True)
    pred_loss = jnp.mean((pred_z - gt3[:, 1:].reshape(b * (n - 1), -1)) ** 2)
    zc = gt_z - gt_z.mean(0, keepdims=True)
    var = (zc ** 2).sum(0) / (gt_z.shape[0] - 1)
    std_loss = jnp.mean(jnp.maximum(1.0 - jnp.sqrt(var + 1e-4), 0.0))
    cov = zc.T @ zc / (gt_z.shape[0] - 1)
    cov_loss = (jnp.sum(cov ** 2) - jnp.sum(jnp.diag(cov) ** 2)) / gt_z.shape[1]
    return pred_loss * MSE_L + std_loss * STD_L + cov_loss * COV_L


# ------------------------------------ main -------------------------------------
if __name__ == "__main__":
    key = jax.random.PRNGKey(0)
    kx, kp = jax.random.split(key)
    x = jax.random.normal(kx, (B, N, C, T, H, W), jnp.float32)
    params = init_params(kp)
    w_slab, vec_slab = pack_params(params)

    loss = jax.block_until_ready(pcnet_forward(x, w_slab, vec_slab))
    ref = ref_forward(x, params)

    assert jnp.isfinite(loss), loss
    assert jnp.allclose(loss, ref, rtol=5e-2, atol=5e-2), (loss, ref)
    print("KERNEL_OK")
</pallas_src>

<mosaic_0001>
module attributes {stable_mosaic.version = 11 : i64} {
  func.func @pcnet_kernel(%arg0: memref<8x1024xf32, #tpu.memory_space<vmem>>, %arg1: memref<640x256xbf16, #tpu.memory_space<vmem>>, %arg2: memref<16x256xf32, #tpu.memory_space<vmem>>, %arg3: memref<1x1xf32, #tpu.memory_space<smem>>) attributes {dimension_semantics = [], scalar_prefetch = 0 : i64, scratch_operands = 0 : i64, tpu.core_type = #tpu.core_type<tc>} {
    %c0 = arith.constant 0 : index
    %c0_0 = arith.constant 0 : index
    %0 = vector.load %arg0[%c0, %c0_0] : memref<8x1024xf32, #tpu.memory_space<vmem>>, vector<8x1024xf32>
    %cst = arith.constant 0.000000e+00 : f32
    %1 = vector.broadcast %cst : f32 to vector<8x128xf32>
    %c4 = arith.constant 4 : index
    %c0_1 = arith.constant 0 : index
    %2 = vector.load %arg2[%c4, %c0_1] : memref<16x256xf32, #tpu.memory_space<vmem>>, vector<1x128xf32>
    %3 = vector.broadcast %2 : vector<1x128xf32> to vector<8x128xf32>
    %4 = arith.addf %1, %3 : vector<8x128xf32>
    %5 = vector.extract_strided_slice %0 {offsets = [0, 0], sizes = [8, 256], strides = [1, 1]} : vector<8x1024xf32> to vector<8x256xf32>
    %cst_2 = arith.constant dense<0.000000e+00> : vector<8xf32>
    %6 = vector.multi_reduction <add>, %5, %cst_2 [1] : vector<8x256xf32> to vector<8xf32>
    %7 = vector.shape_cast %6 : vector<8xf32> to vector<8x1xf32>
    %cst_3 = arith.constant 3.906250e-03 : f32
    %8 = vector.broadcast %cst_3 : f32 to vector<8x1xf32>
    %9 = arith.mulf %7, %8 : vector<8x1xf32>
    %c0_4 = arith.constant 0 : index
    %c0_5 = arith.constant 0 : index
    %10 = vector.load %arg2[%c0_4, %c0_5] : memref<16x256xf32, #tpu.memory_space<vmem>>, vector<1x128xf32>
    %11 = vector.broadcast %9 : vector<8x1xf32> to vector<8x128xf32>
    %12 = vector.broadcast %10 : vector<1x128xf32> to vector<8x128xf32>
    %13 = arith.mulf %11, %12 : vector<8x128xf32>
    %14 = arith.addf %4, %13 : vector<8x128xf32>
    %15 = vector.extract_strided_slice %0 {offsets = [0, 256], sizes = [8, 256], strides = [1, 1]} : vector<8x1024xf32> to vector<8x256xf32>
    %cst_6 = arith.constant dense<0.000000e+00> : vector<8xf32>
    %16 = vector.multi_reduction <add>, %15, %cst_6 [1] : vector<8x256xf32> to vector<8xf32>
    %17 = vector.shape_cast %16 : vector<8xf32> to vector<8x1xf32>
    %cst_7 = arith.constant 3.906250e-03 : f32
    %18 = vector.broadcast %cst_7 : f32 to vector<8x1xf32>
    %19 = arith.mulf %17, %18 : vector<8x1xf32>
    %c1 = arith.constant 1 : index
    %c0_8 = arith.constant 0 : index
    %20 = vector.load %arg2[%c1, %c0_8] : memref<16x256xf32, #tpu.memory_space<vmem>>, vector<1x128xf32>
    %21 = vector.broadcast %19 : vector<8x1xf32> to vector<8x128xf32>
    %22 = vector.broadcast %20 : vector<1x128xf32> to vector<8x128xf32>
    %23 = arith.mulf %21, %22 : vector<8x128xf32>
    %24 = arith.addf %14, %23 : vector<8x128xf32>
    %25 = vector.extract_strided_slice %0 {offsets = [0, 512], sizes = [8, 256], strides = [1, 1]} : vector<8x1024xf32> to vector<8x256xf32>
    %cst_9 = arith.constant dense<0.000000e+00> : vector<8xf32>
    %26 = vector.multi_reduction <add>, %25, %cst_9 [1] : vector<8x256xf32> to vector<8xf32>
    %27 = vector.shape_cast %26 : vector<8xf32> to vector<8x1xf32>
    %cst_10 = arith.constant 3.906250e-03 : f32
    %28 = vector.broadcast %cst_10 : f32 to vector<8x1xf32>
    %29 = arith.mulf %27, %28 : vector<8x1xf32>
    %c2 = arith.constant 2 : index
    %c0_11 = arith.constant 0 : index
    %30 = vector.load %arg2[%c2, %c0_11] : memref<16x256xf32, #tpu.memory_space<vmem>>, vector<1x128xf32>
    %31 = vector.broadcast %29 : vector<8x1xf32> to vector<8x128xf32>
    %32 = vector.broadcast %30 : vector<1x128xf32> to vector<8x128xf32>
    %33 = arith.mulf %31, %32 : vector<8x128xf32>
    %34 = arith.addf %24, %33 : vector<8x128xf32>
    %35 = vector.extract_strided_slice %0 {offsets = [0, 768], sizes = [8, 256], strides = [1, 1]} : vector<8x1024xf32> to vector<8x256xf32>
    %cst_12 = arith.constant dense<0.000000e+00> : vector<8xf32>
    %36 = vector.multi_reduction <add>, %35, %cst_12 [1] : vector<8x256xf32> to vector<8xf32>
    %37 = vector.shape_cast %36 : vector<8xf32> to vector<8x1xf32>
    %cst_13 = arith.constant 3.906250e-03 : f32
    %38 = vector.broadcast %cst_13 : f32 to vector<8x1xf32>
    %39 = arith.mulf %37, %38 : vector<8x1xf32>
    %c3 = arith.constant 3 : index
    %c0_14 = arith.constant 0 : index
    %40 = vector.load %arg2[%c3, %c0_14] : memref<16x256xf32, #tpu.memory_space<vmem>>, vector<1x128xf32>
    %41 = vector.broadcast %39 : vector<8x1xf32> to vector<8x128xf32>
    %42 = vector.broadcast %40 : vector<1x128xf32> to vector<8x128xf32>
    %43 = arith.mulf %41, %42 : vector<8x128xf32>
    %44 = arith.addf %34, %43 : vector<8x128xf32>
    %c0_15 = arith.constant 0 : index
    %c0_16 = arith.constant 0 : index
    %45 = vector.load %arg1[%c0_15, %c0_16] : memref<640x256xbf16, #tpu.memory_space<vmem>>, vector<128x256xbf16>
    %46 = arith.extf %45 : vector<128x256xbf16> to vector<128x256xf32>
    %cst_17 = arith.constant dense<0.000000e+00> : vector<8x256xf32>
    %47 = tpu.matmul %44, %46, %cst_17 {dimension_numbers = #tpu.dot_dimension_numbers<[1], [0], [0], [1], [0, 0, 1, 1], [], []>} : vector<8x128xf32>, vector<128x256xf32>, vector<8x256xf32> -> vector<8x256xf32>
    %c5 = arith.constant 5 : index
    %c0_18 = arith.constant 0 : index
    %48 = vector.load %arg2[%c5, %c0_18] : memref<16x256xf32, #tpu.memory_space<vmem>>, vector<1x256xf32>
    %49 = vector.broadcast %48 : vector<1x256xf32> to vector<8x256xf32>
    %50 = arith.addf %47, %49 : vector<8x256xf32>
    %c6 = arith.constant 6 : index
    %c0_19 = arith.constant 0 : index
    %51 = vector.load %arg2[%c6, %c0_19] : memref<16x256xf32, #tpu.memory_space<vmem>>, vector<1x256xf32>
    %c7 = arith.constant 7 : index
    %c0_20 = arith.constant 0 : index
    %52 = vector.load %arg2[%c7, %c0_20] : memref<16x256xf32, #tpu.memory_space<vmem>>, vector<1x256xf32>
    %cst_21 = arith.constant dense<0.000000e+00> : vector<256xf32>
    %53 = vector.multi_reduction <add>, %50, %cst_21 [0] : vector<8x256xf32> to vector<256xf32>
    %54 = vector.shape_cast %53 : vector<256xf32> to vector<1x256xf32>
    %cst_22 = arith.constant 8.000000e+00 : f32
    %55 = vector.broadcast %cst_22 : f32 to vector<1x256xf32>
    %56 = arith.divf %54, %55 : vector<1x256xf32>
    %57 = vector.broadcast %56 : vector<1x256xf32> to vector<8x256xf32>
    %58 = arith.subf %50, %57 : vector<8x256xf32>
    %59 = arith.mulf %58, %58 : vector<8x256xf32>
    %cst_23 = arith.constant dense<0.000000e+00> : vector<256xf32>
    %60 = vector.multi_reduction <add>, %59, %cst_23 [0] : vector<8x256xf32> to vector<256xf32>
    %61 = vector.shape_cast %60 : vector<256xf32> to vector<1x256xf32>
    %cst_24 = arith.constant 8.000000e+00 : f32
    %62 = vector.broadcast %cst_24 : f32 to vector<1x256xf32>
    %63 = arith.divf %61, %62 : vector<1x256xf32>
    %64 = vector.broadcast %56 : vector<1x256xf32> to vector<8x256xf32>
    %65 = arith.subf %50, %64 : vector<8x256xf32>
    %cst_25 = arith.constant 9.99999974E-6 : f32
    %66 = vector.broadcast %cst_25 : f32 to vector<1x256xf32>
    %67 = arith.addf %63, %66 : vector<1x256xf32>
    %68 = math.rsqrt %67 : vector<1x256xf32>
    %69 = vector.broadcast %68 : vector<1x256xf32> to vector<8x256xf32>
    %70 = arith.mulf %65, %69 : vector<8x256xf32>
    %71 = vector.broadcast %51 : vector<1x256xf32> to vector<8x256xf32>
    %72 = arith.mulf %70, %71 : vector<8x256xf32>
    %73 = vector.broadcast %52 : vector<1x256xf32> to vector<8x256xf32>
    %74 = arith.addf %72, %73 : vector<8x256xf32>
    %cst_26 = arith.constant 0.000000e+00 : f32
    %75 = vector.broadcast %cst_26 : f32 to vector<8x256xf32>
    %76 = arith.maximumf %74, %75 : vector<8x256xf32>
    %c128 = arith.constant 128 : index
    %c0_27 = arith.constant 0 : index
    %77 = vector.load %arg1[%c128, %c0_27] : memref<640x256xbf16, #tpu.memory_space<vmem>>, vector<256x256xbf16>
    %78 = arith.extf %77 : vector<256x256xbf16> to vector<256x256xf32>
    %cst_28 = arith.constant dense<0.000000e+00> : vector<8x256xf32>
    %79 = tpu.matmul %76, %78, %cst_28 {dimension_numbers = #tpu.dot_dimension_numbers<[1], [0], [0], [1], [0, 0, 1, 1], [], []>} : vector<8x256xf32>, vector<256x256xf32>, vector<8x256xf32> -> vector<8x256xf32>
    %c8 = arith.constant 8 : index
    %c0_29 = arith.constant 0 : index
    %80 = vector.load %arg2[%c8, %c0_29] : memref<16x256xf32, #tpu.memory_space<vmem>>, vector<1x256xf32>
    %81 = vector.broadcast %80 : vector<1x256xf32> to vector<8x256xf32>
    %82 = arith.addf %79, %81 : vector<8x256xf32>
    %83 = tpu.iota {dimensions = array<i32: 0>} : vector<8x8xi32>
    %84 = tpu.iota {dimensions = array<i32: 1>} : vector<8x8xi32>
    %c3_i32 = arith.constant 3 : i32
    %85 = vector.broadcast %c3_i32 : i32 to vector<8x8xi32>
    %86 = arith.cmpi eq, %83, %85 : vector<8x8xi32>
    %c7_i32 = arith.constant 7 : i32
    %87 = vector.broadcast %c7_i32 : i32 to vector<8x8xi32>
    %88 = arith.cmpi eq, %83, %87 : vector<8x8xi32>
    %89 = arith.ori %86, %88 : vector<8x8xi1>
    %c1_i32 = arith.constant 1 : i32
    %90 = vector.broadcast %c1_i32 : i32 to vector<8x8xi32>
    %91 = arith.addi %83, %90 : vector<8x8xi32>
    %92 = arith.cmpi eq, %84, %91 : vector<8x8xi32>
    %cst_30 = arith.constant dense<true> : vector<8x8xi1>
    %93 = arith.xori %89, %cst_30 : vector<8x8xi1>
    %94 = arith.andi %92, %93 : vector<8x8xi1>
    %cst_31 = arith.constant 1.000000e+00 : f32
    %cst_32 = arith.constant 0.000000e+00 : f32
    %95 = vector.broadcast %cst_31 : f32 to vector<8x8xf32>
    %96 = vector.broadcast %cst_32 : f32 to vector<8x8xf32>
    %97 = arith.select %94, %95, %96 : vector<8x8xi1>, vector<8x8xf32>
    %cst_33 = arith.constant dense<0.000000e+00> : vector<8xf32>
    %98 = vector.multi_reduction <add>, %97, %cst_33 [1] : vector<8x8xf32> to vector<8xf32>
    %99 = vector.shape_cast %98 : vector<8xf32> to vector<8x1xf32>
    %cst_34 = arith.constant dense<0.000000e+00> : vector<8x256xf32>
    %100 = tpu.matmul %97, %82, %cst_34 {dimension_numbers = #tpu.dot_dimension_numbers<[1], [0], [0], [1], [0, 0, 1, 1], [], []>} : vector<8x8xf32>, vector<8x256xf32>, vector<8x256xf32> -> vector<8x256xf32>
    %c384 = arith.constant 384 : index
    %c0_35 = arith.constant 0 : index
    %101 = vector.load %arg1[%c384, %c0_35] : memref<640x256xbf16, #tpu.memory_space<vmem>>, vector<128x256xbf16>
    %102 = arith.extf %101 : vector<128x256xbf16> to vector<128x256xf32>
    %cst_36 = arith.constant dense<0.000000e+00> : vector<8x128xf32>
    %103 = tpu.matmul %82, %102, %cst_36 {dimension_numbers = #tpu.dot_dimension_numbers<[1], [1], [0], [0], [0, 0, 1, 0], [], []>} : vector<8x256xf32>, vector<128x256xf32>, vector<8x128xf32> -> vector<8x128xf32>
    %c9 = arith.constant 9 : index
    %c0_37 = arith.constant 0 : index
    %104 = vector.load %arg2[%c9, %c0_37] : memref<16x256xf32, #tpu.memory_space<vmem>>, vector<1x128xf32>
    %105 = vector.broadcast %104 : vector<1x128xf32> to vector<8x128xf32>
    %106 = arith.addf %103, %105 : vector<8x128xf32>
    %c10 = arith.constant 10 : index
    %c0_38 = arith.constant 0 : index
    %107 = vector.load %arg2[%c10, %c0_38] : memref<16x256xf32, #tpu.memory_space<vmem>>, vector<1x128xf32>
    %c11 = arith.constant 11 : index
    %c0_39 = arith.constant 0 : index
    %108 = vector.load %arg2[%c11, %c0_39] : memref<16x256xf32, #tpu.memory_space<vmem>>, vector<1x128xf32>
    %109 = vector.broadcast %99 : vector<8x1xf32> to vector<8x128xf32>
    %110 = arith.mulf %106, %109 : vector<8x128xf32>
    %cst_40 = arith.constant dense<0.000000e+00> : vector<128xf32>
    %111 = vector.multi_reduction <add>, %110, %cst_40 [0] : vector<8x128xf32> to vector<128xf32>
    %112 = vector.shape_cast %111 : vector<128xf32> to vector<1x128xf32>
    %cst_41 = arith.constant 0.166666672 : f32
    %113 = vector.broadcast %cst_41 : f32 to vector<1x128xf32>
    %114 = arith.mulf %112, %113 : vector<1x128xf32>
    %115 = vector.broadcast %114 : vector<1x128xf32> to vector<8x128xf32>
    %116 = arith.subf %106, %115 : vector<8x128xf32>
    %117 = arith.mulf %116, %116 : vector<8x128xf32>
    %118 = vector.broadcast %99 : vector<8x1xf32> to vector<8x128xf32>
    %119 = arith.mulf %117, %118 : vector<8x128xf32>
    %cst_42 = arith.constant dense<0.000000e+00> : vector<128xf32>
    %120 = vector.multi_reduction <add>, %119, %cst_42 [0] : vector<8x128xf32> to vector<128xf32>
    %121 = vector.shape_cast %120 : vector<128xf32> to vector<1x128xf32>
    %cst_43 = arith.constant 0.166666672 : f32
    %122 = vector.broadcast %cst_43 : f32 to vector<1x128xf32>
    %123 = arith.mulf %121, %122 : vector<1x128xf32>
    %124 = vector.broadcast %114 : vector<1x128xf32> to vector<8x128xf32>
    %125 = arith.subf %106, %124 : vector<8x128xf32>
    %cst_44 = arith.constant 9.99999974E-6 : f32
    %126 = vector.broadcast %cst_44 : f32 to vector<1x128xf32>
    %127 = arith.addf %123, %126 : vector<1x128xf32>
    %128 = math.rsqrt %127 : vector<1x128xf32>
    %129 = vector.broadcast %128 : vector<1x128xf32> to vector<8x128xf32>
    %130 = arith.mulf %125, %129 : vector<8x128xf32>
    %131 = vector.broadcast %107 : vector<1x128xf32> to vector<8x128xf32>
    %132 = arith.mulf %130, %131 : vector<8x128xf32>
    %133 = vector.broadcast %108 : vector<1x128xf32> to vector<8x128xf32>
    %134 = arith.addf %132, %133 : vector<8x128xf32>
    %cst_45 = arith.constant 0.000000e+00 : f32
    %135 = vector.broadcast %cst_45 : f32 to vector<8x128xf32>
    %136 = arith.maximumf %134, %135 : vector<8x128xf32>
    %c512 = arith.constant 512 : index
    %c0_46 = arith.constant 0 : index
    %137 = vector.load %arg1[%c512, %c0_46] : memref<640x256xbf16, #tpu.memory_space<vmem>>, vector<128x256xbf16>
    %138 = arith.extf %137 : vector<128x256xbf16> to vector<128x256xf32>
    %cst_47 = arith.constant dense<0.000000e+00> : vector<8x256xf32>
    %139 = tpu.matmul %136, %138, %cst_47 {dimension_numbers = #tpu.dot_dimension_numbers<[1], [0], [0], [1], [0, 0, 1, 1], [], []>} : vector<8x128xf32>, vector<128x256xf32>, vector<8x256xf32> -> vector<8x256xf32>
    %c12 = arith.constant 12 : index
    %c0_48 = arith.constant 0 : index
    %140 = vector.load %arg2[%c12, %c0_48] : memref<16x256xf32, #tpu.memory_space<vmem>>, vector<1x256xf32>
    %141 = vector.broadcast %140 : vector<1x256xf32> to vector<8x256xf32>
    %142 = arith.addf %139, %141 : vector<8x256xf32>
    %143 = arith.addf %142, %82 : vector<8x256xf32>
    %144 = arith.subf %143, %100 : vector<8x256xf32>
    %145 = vector.broadcast %99 : vector<8x1xf32> to vector<8x256xf32>
    %146 = arith.mulf %144, %145 : vector<8x256xf32>
    %147 = arith.mulf %146, %146 : vector<8x256xf32>
    %148 = vector.shape_cast %147 : vector<8x256xf32> to vector<1x8x256xf32>
    %cst_49 = arith.constant dense<0.000000e+00> : vector<1xf32>
    %149 = vector.multi_reduction <add>, %148, %cst_49 [1, 2] : vector<1x8x256xf32> to vector<1xf32>
    %150 = vector.shape_cast %149 : vector<1xf32> to vector<1x1x1xf32>
    %151 = vector.extract %150[0, 0, 0] : f32 from vector<1x1x1xf32>
    %cst_50 = arith.constant 6.51041686E-4 : f32
    %152 = arith.mulf %151, %cst_50 : f32
    %cst_51 = arith.constant dense<0.000000e+00> : vector<256xf32>
    %153 = vector.multi_reduction <add>, %82, %cst_51 [0] : vector<8x256xf32> to vector<256xf32>
    %154 = vector.shape_cast %153 : vector<256xf32> to vector<1x256xf32>
    %cst_52 = arith.constant 8.000000e+00 : f32
    %155 = vector.broadcast %cst_52 : f32 to vector<1x256xf32>
    %156 = arith.divf %154, %155 : vector<1x256xf32>
    %157 = vector.broadcast %156 : vector<1x256xf32> to vector<8x256xf32>
    %158 = arith.subf %82, %157 : vector<8x256xf32>
    %159 = arith.mulf %158, %158 : vector<8x256xf32>
    %cst_53 = arith.constant dense<0.000000e+00> : vector<256xf32>
    %160 = vector.multi_reduction <add>, %159, %cst_53 [0] : vector<8x256xf32> to vector<256xf32>
    %161 = vector.shape_cast %160 : vector<256xf32> to vector<1x256xf32>
    %cst_54 = arith.constant 0.142857149 : f32
    %162 = vector.broadcast %cst_54 : f32 to vector<1x256xf32>
    %163 = arith.mulf %161, %162 : vector<1x256xf32>
    %cst_55 = arith.constant 9.99999974E-5 : f32
    %164 = vector.broadcast %cst_55 : f32 to vector<1x256xf32>
    %165 = arith.addf %163, %164 : vector<1x256xf32>
    %166 = math.sqrt %165 : vector<1x256xf32>
    %cst_56 = arith.constant 1.000000e+00 : f32
    %167 = vector.broadcast %cst_56 : f32 to vector<1x256xf32>
    %168 = arith.subf %167, %166 : vector<1x256xf32>
    %cst_57 = arith.constant 0.000000e+00 : f32
    %169 = vector.broadcast %cst_57 : f32 to vector<1x256xf32>
    %170 = arith.maximumf %168, %169 : vector<1x256xf32>
    %171 = vector.shape_cast %170 : vector<1x256xf32> to vector<1x1x256xf32>
    %cst_58 = arith.constant dense<0.000000e+00> : vector<1xf32>
    %172 = vector.multi_reduction <add>, %171, %cst_58 [1, 2] : vector<1x1x256xf32> to vector<1xf32>
    %173 = vector.shape_cast %172 : vector<1xf32> to vector<1x1x1xf32>
    %174 = vector.extract %173[0, 0, 0] : f32 from vector<1x1x1xf32>
    %cst_59 = arith.constant 2.560000e+02 : f32
    %175 = arith.divf %174, %cst_59 : f32
    %cst_60 = arith.constant dense<0.000000e+00> : vector<8x8xf32>
    %176 = tpu.matmul %158, %158, %cst_60 {dimension_numbers = #tpu.dot_dimension_numbers<[1], [1], [0], [0], [0, 0, 1, 0], [], []>} : vector<8x256xf32>, vector<8x256xf32>, vector<8x8xf32> -> vector<8x8xf32>
    %177 = arith.mulf %176, %176 : vector<8x8xf32>
    %178 = vector.shape_cast %177 : vector<8x8xf32> to vector<1x8x8xf32>
    %cst_61 = arith.constant dense<0.000000e+00> : vector<1xf32>
    %179 = vector.multi_reduction <add>, %178, %cst_61 [1, 2] : vector<1x8x8xf32> to vector<1xf32>
    %180 = vector.shape_cast %179 : vector<1xf32> to vector<1x1x1xf32>
    %181 = vector.extract %180[0, 0, 0] : f32 from vector<1x1x1xf32>
    %cst_62 = arith.constant 0.0204081628 : f32
    %182 = arith.mulf %181, %cst_62 : f32
    %183 = arith.mulf %163, %163 : vector<1x256xf32>
    %184 = vector.shape_cast %183 : vector<1x256xf32> to vector<1x1x256xf32>
    %cst_63 = arith.constant dense<0.000000e+00> : vector<1xf32>
    %185 = vector.multi_reduction <add>, %184, %cst_63 [1, 2] : vector<1x1x256xf32> to vector<1xf32>
    %186 = vector.shape_cast %185 : vector<1xf32> to vector<1x1x1xf32>
    %187 = vector.extract %186[0, 0, 0] : f32 from vector<1x1x1xf32>
    %188 = arith.subf %182, %187 : f32
    %cst_64 = arith.constant 3.906250e-03 : f32
    %189 = arith.mulf %188, %cst_64 : f32
    %cst_65 = arith.constant 1.000000e+00 : f32
    %190 = arith.mulf %152, %cst_65 : f32
    %cst_66 = arith.constant 0.000000e+00 : f32
    %191 = arith.addf %190, %cst_66 : f32
    %cst_67 = arith.constant 1.000000e+00 : f32
    %192 = arith.mulf %175, %cst_67 : f32
    %193 = arith.addf %191, %192 : f32
    %cst_68 = arith.constant 4.000000e-02 : f32
    %194 = arith.mulf %189, %cst_68 : f32
    %195 = arith.addf %193, %194 : f32
    %c0_69 = arith.constant 0 : index
    %c0_70 = arith.constant 0 : index
    %196 = memref.load %arg3[%c0_69, %c0_70] : memref<1x1xf32, #tpu.memory_space<smem>>
    memref.store %195, %arg3[%c0_69, %c0_70] : memref<1x1xf32, #tpu.memory_space<smem>>
    return
  }
}

</mosaic_0001>

<llo_original>
// kernel: pcnet_forward.1
$region0: #{pcnet_forward.1}
  #allocation0 [shape = 'u32[]', space=smem, size = 0x4, offset = 0x4, fixed_abs, tag = 'smem constant byte address 0x4 - core index']
  #allocation1 [shape = 'u32[72,128]{1,0:T(1,128)}', space=vmem, size = 0x9000, scoped, tag = 'internal scratch']
  %s0 = inlined_call_operand.vmem [shape: f32[8,1024], index: 0, kind: input, shape index: {}]
  %s1 = inlined_call_operand.vmem [shape: bf16[640,256], index: 1, kind: input, shape index: {}]
  %s2 = inlined_call_operand.vmem [shape: f32[16,256], index: 2, kind: input, shape index: {}]
  %s3 = inlined_call_operand.hbm [shape: f32[1,1], index: 3, kind: output, shape index: {}]
  %s4 = sld [smem:[#allocation0]]
  $region22: #{pcnet_forward.1} parent=0
    _
  %s6 = ssub.s32 1, %s4
  %s7 = scalar_select 0, %s6, %s4
  $region1: #{pcnet_forward.1} parent=0
    #allocation2 [shape = 'u8[512]{0}', space=smem, size = 0x200, scoped, tag = 'output window, operand 0, single buffered']
    #allocation3 [shape = 's32[1]{0}', space=sflag, size = 0x4, scoped, tag = 'scoped memory for pcnet_forward.1']
    %8 = vsyncpa [#allocation3], 0
    // Predicated region
    $region2: #{pcnet_forward.1} parent=1 // pred_check
      _
    $region3: #{pcnet_forward.1} parent=1 // pred_check_branch
      %10 = sbr.rel (0) target = $region5
    $region4: #{pcnet_forward.1} parent=1 // pred_region
      _
    $region5: #{pcnet_forward.1} parent=1 // pred_fallthru
      _
    // Predicated region
    $region6: #{pcnet_forward.1} parent=1 // pred_check
      _
    $region7: #{pcnet_forward.1} parent=1 // pred_check_branch
      %12 = sbr.rel (0) target = $region9
    $region8: #{pcnet_forward.1} parent=1 // pred_region
      _
    $region9: #{pcnet_forward.1} parent=1 // pred_fallthru
      _
    // Predicated region
    $region10: #{pcnet_forward.1} parent=1 // pred_check
      _
    $region11: #{pcnet_forward.1} parent=1 // pred_check_branch
      %14 = sbr.rel (0) target = $region13
    $region12: #{pcnet_forward.1} parent=1 // pred_region
      _
    $region13: #{pcnet_forward.1} parent=1 // pred_fallthru
      _
    %v15 = vld [vmem:[%s0] sm:$0xff]
    %v16 = vld [vmem:[%s0 + $0x8] sm:$0xff]
    %v17 = vld [vmem:[%s0 + $0x10] sm:$0xff]
    %v18 = vld [vmem:[%s0 + $0x18] sm:$0xff]
    %v19 = vld [vmem:[%s0 + $0x20] sm:$0xff]
    %v20 = vld [vmem:[%s0 + $0x28] sm:$0xff]
    %v21 = vld [vmem:[%s0 + $0x30] sm:$0xff]
    %v22 = vld [vmem:[%s0 + $0x38] sm:$0xff]
    %v23 = vld [vmem:[%s2 + $0x4] ss:$0 sm:$0xff]
    %v24 = vadd.f32 %v23, 0.0
    %v25 = vadd.f32 %v15, %v16
    %26 = vadd.xlane.f32.xlu0 %v25
    %v27 = vpop.xlane.xlu0 %26
    %v28 = vmul.f32 %v27, 0.00390625
    %v29 = vld [vmem:[%s2] ss:$0 sm:$0xff]
    %v30 = vmul.f32 %v28, %v29
    %v31 = vadd.f32 %v24, %v30
    %v32 = vadd.f32 %v17, %v18
    %33 = vadd.xlane.f32.xlu0 %v32
    %v34 = vpop.xlane.xlu0 %33
    %v35 = vmul.f32 %v34, 0.00390625
    %v36 = vld [vmem:[%s2 + $0x1] ss:$0 sm:$0xff]
    %v37 = vmul.f32 %v35, %v36
    %v38 = vadd.f32 %v31, %v37
    %v39 = vadd.f32 %v19, %v20
    %40 = vadd.xlane.f32.xlu0 %v39
    %v41 = vpop.xlane.xlu0 %40
    %v42 = vmul.f32 %v41, 0.00390625
    %v43 = vld [vmem:[%s2 + $0x2] ss:$0 sm:$0xff]
    %v44 = vmul.f32 %v42, %v43
    %v45 = vadd.f32 %v38, %v44
    %v46 = vadd.f32 %v21, %v22
    %47 = vadd.xlane.f32.xlu0 %v46
    %v48 = vpop.xlane.xlu0 %47
    %v49 = vmul.f32 %v48, 0.00390625
    %v50 = vld [vmem:[%s2 + $0x3] ss:$0 sm:$0xff]
    %v51 = vmul.f32 %v49, %v50
    %v52 = vadd.f32 %v45, %v51
    %v53 = vld [vmem:[%s1] sm:$0xff]
    %v54 = vld [vmem:[%s1 + $0x8] sm:$0xff]
    %v55 = vld [vmem:[%s1 + $0x10] sm:$0xff]
    %v56 = vld [vmem:[%s1 + $0x18] sm:$0xff]
    %v57 = vld [vmem:[%s1 + $0x20] sm:$0xff]
    %v58 = vld [vmem:[%s1 + $0x28] sm:$0xff]
    %v59 = vld [vmem:[%s1 + $0x30] sm:$0xff]
    %v60 = vld [vmem:[%s1 + $0x38] sm:$0xff]
    %v61 = vld [vmem:[%s1 + $0x40] sm:$0xff]
    %v62 = vld [vmem:[%s1 + $0x48] sm:$0xff]
    %v63 = vld [vmem:[%s1 + $0x50] sm:$0xff]
    %v64 = vld [vmem:[%s1 + $0x58] sm:$0xff]
    %v65 = vld [vmem:[%s1 + $0x60] sm:$0xff]
    %v66 = vld [vmem:[%s1 + $0x68] sm:$0xff]
    %v67 = vld [vmem:[%s1 + $0x70] sm:$0xff]
    %v68 = vld [vmem:[%s1 + $0x78] sm:$0xff]
    %v69 = vunpack.c.l.bf16 %v53
    %v70 = vunpack.c.h.bf16 %v53
    %v71 = vunpack.c.l.bf16 %v54
    %v72 = vunpack.c.h.bf16 %v54
    %v73 = vunpack.c.l.bf16 %v55
    %v74 = vunpack.c.h.bf16 %v55
    %v75 = vunpack.c.l.bf16 %v56
    %v76 = vunpack.c.h.bf16 %v56
    %v77 = vunpack.c.l.bf16 %v57
    %v78 = vunpack.c.h.bf16 %v57
    %v79 = vunpack.c.l.bf16 %v58
    %v80 = vunpack.c.h.bf16 %v58
    %v81 = vunpack.c.l.bf16 %v59
    %v82 = vunpack.c.h.bf16 %v59
    %v83 = vunpack.c.l.bf16 %v60
    %v84 = vunpack.c.h.bf16 %v60
    %v85 = vunpack.c.l.bf16 %v61
    %v86 = vunpack.c.h.bf16 %v61
    %v87 = vunpack.c.l.bf16 %v62
    %v88 = vunpack.c.h.bf16 %v62
    %v89 = vunpack.c.l.bf16 %v63
    %v90 = vunpack.c.h.bf16 %v63
    %v91 = vunpack.c.l.bf16 %v64
    %v92 = vunpack.c.h.bf16 %v64
    %v93 = vunpack.c.l.bf16 %v65
    %v94 = vunpack.c.h.bf16 %v65
    %v95 = vunpack.c.l.bf16 %v66
    %v96 = vunpack.c.h.bf16 %v66
    %v97 = vunpack.c.l.bf16 %v67
    %v98 = vunpack.c.h.bf16 %v67
    %v99 = vunpack.c.l.bf16 %v68
    %v100 = vunpack.c.h.bf16 %v68
    %s101 = scalar_lea.vmem %s2, 5
    %v102 = vld [vmem:[%s101] ss:$8 sm:$0x3]
    %v104 = vperm.slane %v102, 0
    %v105 = vperm.slane %v102, 1
    %108 = vmatpush.msra.mxu0 %v99
    %109 = vmatpush.msra.mxu0 %v97
    %110 = vmatpush.msra.mxu0 %v95
    %111 = vmatpush.msra.mxu0 %v93
    %112 = vmatpush.msra.mxu0 %v91
    %113 = vmatpush.msra.mxu0 %v89
    %114 = vmatpush.msra.mxu0 %v87
    %115 = vmatpush.msra.mxu0 %v85
    %116 = vmatpush.msra.mxu0 %v83
    %117 = vmatpush.msra.mxu0 %v81
    %118 = vmatpush.msra.mxu0 %v79
    %119 = vmatpush.msra.mxu0 %v77
    %120 = vmatpush.msra.mxu0 %v75
    %121 = vmatpush.msra.mxu0 %v73
    %122 = vmatpush.msra.mxu0 %v71
    %123 = vmatpush.msra.mxu0 %v69
    %124 = vmatmul.f32.gmra.mxu0 %v52
    %v125 = vpop.f32.mrf.mxu0
    %v126 = vadd.f32 %v104, %v125
    %127 = vdwg.mxu0
    %128 = vmatpush.msra.mxu0 %v100
    %129 = vmatpush.msra.mxu0 %v98
    %130 = vmatpush.msra.mxu0 %v96
    %131 = vmatpush.msra.mxu0 %v94
    %132 = vmatpush.msra.mxu0 %v92
    %133 = vmatpush.msra.mxu0 %v90
    %134 = vmatpush.msra.mxu0 %v88
    %135 = vmatpush.msra.mxu0 %v86
    %136 = vmatpush.msra.mxu0 %v84
    %137 = vmatpush.msra.mxu0 %v82
    %138 = vmatpush.msra.mxu0 %v80
    %139 = vmatpush.msra.mxu0 %v78
    %140 = vmatpush.msra.mxu0 %v76
    %141 = vmatpush.msra.mxu0 %v74
    %142 = vmatpush.msra.mxu0 %v72
    %143 = vmatpush.msra.mxu0 %v70
    %144 = vmatmul.f32.gmra.mxu0 %v52
    %v145 = vpop.f32.mrf.mxu0
    %v146 = vadd.f32 %v105, %v145
    %147 = vdwg.mxu0
    %s148 = scalar_lea.vmem %s2, 6
    %v149 = vld [vmem:[%s148] ss:$8 sm:$0x3]
    %s150 = scalar_lea.vmem %s2, 7
    %v151 = vld [vmem:[%s150] ss:$8 sm:$0x3]
    %v152 = vrot.slane %v126, 4
    %v153 = vadd.f32 %v126, %v152
    %v154 = vrot.slane %v153, 2
    %v155 = vadd.f32 %v153, %v154
    %v156 = vrot.slane %v155, 1
    %v157 = vadd.f32 %v155, %v156
    %v158 = vrot.slane %v146, 4
    %v159 = vadd.f32 %v146, %v158
    %v160 = vrot.slane %v159, 2
    %v161 = vadd.f32 %v159, %v160
    %v162 = vrot.slane %v161, 1
    %v163 = vadd.f32 %v161, %v162
    %v164 = vrcp.pop 8.0
    %v165 = vmul.f32 8.0, %v164
    %v166 = vsub.f32 1.0, %v165
    %v167 = vmul.f32 %v164, %v166
    %v168 = vadd.f32 %v164, %v167
    %vm169 = vweird.f32 %v164
    %v170 = vsel %vm169, %v164, %v168
    %v171 = vmul.f32 %v157, %v170
    %v172 = vmul.f32 %v163, %v170
    %v173 = vsub.f32 %v126, %v171
    %v174 = vsub.f32 %v146, %v172
    %v175 = vmul.f32 %v173, %v173
    %v176 = vmul.f32 %v174, %v174
    %v177 = vrot.slane %v175, 4
    %v178 = vadd.f32 %v175, %v177
    %v179 = vrot.slane %v178, 2
    %v180 = vadd.f32 %v178, %v179
    %v181 = vrot.slane %v180, 1
    %v182 = vadd.f32 %v180, %v181
    %v183 = vrot.slane %v176, 4
    %v184 = vadd.f32 %v176, %v183
    %v185 = vrot.slane %v184, 2
    %v186 = vadd.f32 %v184, %v185
    %v187 = vrot.slane %v186, 1
    %v188 = vadd.f32 %v186, %v187
    %v189 = vmul.f32 %v182, %v170
    %v190 = vmul.f32 %v188, %v170
    %v191 = vadd.f32 %v189, 1e-05
    %v192 = vadd.f32 %v190, 1e-05
    %v193 = vrsqrt.pop %v191
    %v194 = vmul.f32 %v193, %v191
    %v195 = vmul.f32 %v194, %v193
    %v196 = vmul.f32 0.5, %v195
    %v197 = vsub.f32 1.5, %v196
    %v198 = vmul.f32 %v193, %v197
    %vm199 = vweird.f32 %v191
    %vm200 = vweird.f32 %v193
    %vm201 = vmor %vm199, %vm200
    %v202 = vsel %vm201, %v193, %v198
    %v203 = vrsqrt.pop %v192
    %v204 = vmul.f32 %v203, %v192
    %v205 = vmul.f32 %v204, %v203
    %v206 = vmul.f32 0.5, %v205
    %v207 = vsub.f32 1.5, %v206
    %v208 = vmul.f32 %v203, %v207
    %vm209 = vweird.f32 %v192
    %vm210 = vweird.f32 %v203
    %vm211 = vmor %vm209, %vm210
    %v212 = vsel %vm211, %v203, %v208
    %v213 = vmul.f32 %v173, %v202
    %v214 = vmul.f32 %v174, %v212
    %v216 = vperm.slane %v149, 0
    %v217 = vperm.slane %v149, 1
    %v220 = vmul.f32 %v213, %v216
    %v221 = vmul.f32 %v214, %v217
    %v223 = vperm.slane %v151, 0
    %v224 = vperm.slane %v151, 1
    %v227 = vadd.f32 %v220, %v223
    %v228 = vadd.f32 %v221, %v224
    %v229 = vmax.f32 %v227, 0.0
    %v230 = vmax.f32 %v228, 0.0
    %v231 = vld [vmem:[%s1 + $0x80] sm:$0xff]
    %v232 = vld [vmem:[%s1 + $0x88] sm:$0xff]
    %v233 = vld [vmem:[%s1 + $0x90] sm:$0xff]
    %v234 = vld [vmem:[%s1 + $0x98] sm:$0xff]
    %v235 = vld [vmem:[%s1 + $0xa0] sm:$0xff]
    %v236 = vld [vmem:[%s1 + $0xa8] sm:$0xff]
    %v237 = vld [vmem:[%s1 + $0xb0] sm:$0xff]
    %v238 = vld [vmem:[%s1 + $0xb8] sm:$0xff]
    %v239 = vld [vmem:[%s1 + $0xc0] sm:$0xff]
    %v240 = vld [vmem:[%s1 + $0xc8] sm:$0xff]
    %v241 = vld [vmem:[%s1 + $0xd0] sm:$0xff]
    %v242 = vld [vmem:[%s1 + $0xd8] sm:$0xff]
    %v243 = vld [vmem:[%s1 + $0xe0] sm:$0xff]
    %v244 = vld [vmem:[%s1 + $0xe8] sm:$0xff]
    %v245 = vld [vmem:[%s1 + $0xf0] sm:$0xff]
    %v246 = vld [vmem:[%s1 + $0xf8] sm:$0xff]
    %v247 = vld [vmem:[%s1 + $0x100] sm:$0xff]
    %v248 = vld [vmem:[%s1 + $0x108] sm:$0xff]
    %v249 = vld [vmem:[%s1 + $0x110] sm:$0xff]
    %v250 = vld [vmem:[%s1 + $0x118] sm:$0xff]
    %v251 = vld [vmem:[%s1 + $0x120] sm:$0xff]
    %v252 = vld [vmem:[%s1 + $0x128] sm:$0xff]
    %v253 = vld [vmem:[%s1 + $0x130] sm:$0xff]
    %v254 = vld [vmem:[%s1 + $0x138] sm:$0xff]
    %v255 = vld [vmem:[%s1 + $0x140] sm:$0xff]
    %v256 = vld [vmem:[%s1 + $0x148] sm:$0xff]
    %v257 = vld [vmem:[%s1 + $0x150] sm:$0xff]
    %v258 = vld [vmem:[%s1 + $0x158] sm:$0xff]
    %v259 = vld [vmem:[%s1 + $0x160] sm:$0xff]
    %v260 = vld [vmem:[%s1 + $0x168] sm:$0xff]
    %v261 = vld [vmem:[%s1 + $0x170] sm:$0xff]
    %v262 = vld [vmem:[%s1 + $0x178] sm:$0xff]
    %v263 = vunpack.c.l.bf16 %v231
    %v264 = vunpack.c.h.bf16 %v231
    %v265 = vunpack.c.l.bf16 %v232
    %v266 = vunpack.c.h.bf16 %v232
    %v267 = vunpack.c.l.bf16 %v233
    %v268 = vunpack.c.h.bf16 %v233
    %v269 = vunpack.c.l.bf16 %v234
    %v270 = vunpack.c.h.bf16 %v234
    %v271 = vunpack.c.l.bf16 %v235
    %v272 = vunpack.c.h.bf16 %v235
    %v273 = vunpack.c.l.bf16 %v236
    %v274 = vunpack.c.h.bf16 %v236
    %v275 = vunpack.c.l.bf16 %v237
    %v276 = vunpack.c.h.bf16 %v237
    %v277 = vunpack.c.l.bf16 %v238
    %v278 = vunpack.c.h.bf16 %v238
    %v279 = vunpack.c.l.bf16 %v239
    %v280 = vunpack.c.h.bf16 %v239
    %v281 = vunpack.c.l.bf16 %v240
    %v282 = vunpack.c.h.bf16 %v240
    %v283 = vunpack.c.l.bf16 %v241
    %v284 = vunpack.c.h.bf16 %v241
    %v285 = vunpack.c.l.bf16 %v242
    %v286 = vunpack.c.h.bf16 %v242
    %v287 = vunpack.c.l.bf16 %v243
    %v288 = vunpack.c.h.bf16 %v243
    %v289 = vunpack.c.l.bf16 %v244
    %v290 = vunpack.c.h.bf16 %v244
    %v291 = vunpack.c.l.bf16 %v245
    %v292 = vunpack.c.h.bf16 %v245
    %v293 = vunpack.c.l.bf16 %v246
    %v294 = vunpack.c.h.bf16 %v246
    %v295 = vunpack.c.l.bf16 %v247
    %v296 = vunpack.c.h.bf16 %v247
    %v297 = vunpack.c.l.bf16 %v248
    %v298 = vunpack.c.h.bf16 %v248
    %v299 = vunpack.c.l.bf16 %v249
    %v300 = vunpack.c.h.bf16 %v249
    %v301 = vunpack.c.l.bf16 %v250
    %v302 = vunpack.c.h.bf16 %v250
    %v303 = vunpack.c.l.bf16 %v251
    %v304 = vunpack.c.h.bf16 %v251
    %v305 = vunpack.c.l.bf16 %v252
    %v306 = vunpack.c.h.bf16 %v252
    %v307 = vunpack.c.l.bf16 %v253
    %v308 = vunpack.c.h.bf16 %v253
    %v309 = vunpack.c.l.bf16 %v254
    %v310 = vunpack.c.h.bf16 %v254
    %v311 = vunpack.c.l.bf16 %v255
    %v312 = vunpack.c.h.bf16 %v255
    %v313 = vunpack.c.l.bf16 %v256
    %v314 = vunpack.c.h.bf16 %v256
    %v315 = vunpack.c.l.bf16 %v257
    %v316 = vunpack.c.h.bf16 %v257
    %v317 = vunpack.c.l.bf16 %v258
    %v318 = vunpack.c.h.bf16 %v258
    %v319 = vunpack.c.l.bf16 %v259
    %v320 = vunpack.c.h.bf16 %v259
    %v321 = vunpack.c.l.bf16 %v260
    %v322 = vunpack.c.h.bf16 %v260
    %v323 = vunpack.c.l.bf16 %v261
    %v324 = vunpack.c.h.bf16 %v261
    %v325 = vunpack.c.l.bf16 %v262
    %v326 = vunpack.c.h.bf16 %v262
    %s327 = scalar_lea.vmem %s2, 16
    %v328 = vld [vmem:[%s327] ss:$8 sm:$0x3]
    %v330 = vperm.slane %v328, 0
    %v331 = vperm.slane %v328, 1
    %334 = vmatpush.msra.mxu0 %v293
    %335 = vmatpush.msra.mxu0 %v291
    %336 = vmatpush.msra.mxu0 %v289
    %337 = vmatpush.msra.mxu0 %v287
    %338 = vmatpush.msra.mxu0 %v285
    %339 = vmatpush.msra.mxu0 %v283
    %340 = vmatpush.msra.mxu0 %v281
    %341 = vmatpush.msra.mxu0 %v279
    %342 = vmatpush.msra.mxu0 %v277
    %343 = vmatpush.msra.mxu0 %v275
    %344 = vmatpush.msra.mxu0 %v273
    %345 = vmatpush.msra.mxu0 %v271
    %346 = vmatpush.msra.mxu0 %v269
    %347 = vmatpush.msra.mxu0 %v267
    %348 = vmatpush.msra.mxu0 %v265
    %349 = vmatpush.msra.mxu0 %v263
    %350 = vmatmul.f32.gmra.mxu0 %v229
    %v351 = vpop.f32.mrf.mxu0
    %v352 = vadd.f32 %v330, %v351
    %353 = vdwg.mxu0
    %354 = vmatpush.msra.mxu0 %v325
    %355 = vmatpush.msra.mxu0 %v323
    %356 = vmatpush.msra.mxu0 %v321
    %357 = vmatpush.msra.mxu0 %v319
    %358 = vmatpush.msra.mxu0 %v317
    %359 = vmatpush.msra.mxu0 %v315
    %360 = vmatpush.msra.mxu0 %v313
    %361 = vmatpush.msra.mxu0 %v311
    %362 = vmatpush.msra.mxu0 %v309
    %363 = vmatpush.msra.mxu0 %v307
    %364 = vmatpush.msra.mxu0 %v305
    %365 = vmatpush.msra.mxu0 %v303
    %366 = vmatpush.msra.mxu0 %v301
    %367 = vmatpush.msra.mxu0 %v299
    %368 = vmatpush.msra.mxu0 %v297
    %369 = vmatpush.msra.mxu0 %v295
    %370 = vmatmul.f32.gmra.mxu0 %v230
    %v371 = vpop.f32.mrf.mxu0
    %v372 = vadd.f32 %v352, %v371
    %373 = vdwg.mxu0
    %374 = vmatpush.msra.mxu0 %v294
    %375 = vmatpush.msra.mxu0 %v292
    %376 = vmatpush.msra.mxu0 %v290
    %377 = vmatpush.msra.mxu0 %v288
    %378 = vmatpush.msra.mxu0 %v286
    %379 = vmatpush.msra.mxu0 %v284
    %380 = vmatpush.msra.mxu0 %v282
    %381 = vmatpush.msra.mxu0 %v280
    %382 = vmatpush.msra.mxu0 %v278
    %383 = vmatpush.msra.mxu0 %v276
    %384 = vmatpush.msra.mxu0 %v274
    %385 = vmatpush.msra.mxu0 %v272
    %386 = vmatpush.msra.mxu0 %v270
    %387 = vmatpush.msra.mxu0 %v268
    %388 = vmatpush.msra.mxu0 %v266
    %389 = vmatpush.msra.mxu0 %v264
    %390 = vmatmul.f32.gmra.mxu0 %v229
    %v391 = vpop.f32.mrf.mxu0
    %v392 = vadd.f32 %v331, %v391
    %393 = vdwg.mxu0
    %394 = vmatpush.msra.mxu0 %v326
    %395 = vmatpush.msra.mxu0 %v324
    %396 = vmatpush.msra.mxu0 %v322
    %397 = vmatpush.msra.mxu0 %v320
    %398 = vmatpush.msra.mxu0 %v318
    %399 = vmatpush.msra.mxu0 %v316
    %400 = vmatpush.msra.mxu0 %v314
    %401 = vmatpush.msra.mxu0 %v312
    %402 = vmatpush.msra.mxu0 %v310
    %403 = vmatpush.msra.mxu0 %v308
    %404 = vmatpush.msra.mxu0 %v306
    %405 = vmatpush.msra.mxu0 %v304
    %406 = vmatpush.msra.mxu0 %v302
    %407 = vmatpush.msra.mxu0 %v300
    %408 = vmatpush.msra.mxu0 %v298
    %409 = vmatpush.msra.mxu0 %v296
    %410 = vmatmul.f32.gmra.mxu0 %v230
    %v411 = vpop.f32.mrf.mxu0
    %v412 = vadd.f32 %v392, %v411
    %413 = vdwg.mxu0
    %v414 = vlaneseq
    %v415 = vshrl.u32 %v414, 7
    %v416 = vlaneseq
    %v417 = vand.u32 %v416, 127
    %vm418 = vcmp.eq.s32.totalorder %v415, 3
    %vm419 = vcmp.eq.s32.totalorder %v415, 7
    %vm420 = vmor %vm418, %vm419
    %v421 = vadd.s32 %v415, 1
    %vm422 = vcmp.eq.s32.totalorder %v417, %v421
    %vm423 = vmxor %vm420, 1
    %vm424 = vmand %vm422, %vm423
    %v425 = vsel %vm424, 1.0, 0.0
    %vm426 = vcmask 64512
    %v427 = vsel %vm426, %v425, 0.0
    %428 = vadd.xlane.f32.xlu0 %v427
    %v429 = vpop.xlane.xlu0 %428
    %v431 = vsel %vm426, %v425, 0
    %433 = vmatpush.msra.mxu0 0.0
    %434 = vmatpush.msra.mxu0 0.0
    %435 = vmatpush.msra.mxu0 0.0
    %436 = vmatpush.msra.mxu0 0.0
    %437 = vmatpush.msra.mxu0 0.0
    %438 = vmatpush.msra.mxu0 0.0
    %439 = vmatpush.msra.mxu0 0.0
    %440 = vmatpush.msra.mxu0 0.0
    %441 = vmatpush.msra.mxu0 0.0
    %442 = vmatpush.msra.mxu0 0.0
    %443 = vmatpush.msra.mxu0 0.0
    %444 = vmatpush.msra.mxu0 0.0
    %445 = vmatpush.msra.mxu0 0.0
    %446 = vmatpush.msra.mxu0 0.0
    %447 = vmatpush.msra.mxu0 0.0
    %448 = vmatpush.msra.mxu0 %v372
    %449 = vmatmul.f32.gmra.mxu0 %v431
    %v450 = vpop.f32.mrf.mxu0
    %v451 = vadd.f32 0.0, %v450
    %452 = vdwg.mxu0
    %453 = vmatpush.msra.mxu0 0.0
    %454 = vmatpush.msra.mxu0 0.0
    %455 = vmatpush.msra.mxu0 0.0
    %456 = vmatpush.msra.mxu0 0.0
    %457 = vmatpush.msra.mxu0 0.0
    %458 = vmatpush.msra.mxu0 0.0
    %459 = vmatpush.msra.mxu0 0.0
    %460 = vmatpush.msra.mxu0 0.0
    %461 = vmatpush.msra.mxu0 0.0
    %462 = vmatpush.msra.mxu0 0.0
    %463 = vmatpush.msra.mxu0 0.0
    %464 = vmatpush.msra.mxu0 0.0
    %465 = vmatpush.msra.mxu0 0.0
    %466 = vmatpush.msra.mxu0 0.0
    %467 = vmatpush.msra.mxu0 0.0
    %468 = vmatpush.msra.mxu0 %v412
    %469 = vmatmul.f32.gmra.mxu0 %v431
    %v470 = vpop.f32.mrf.mxu0
    %v471 = vadd.f32 0.0, %v470
    %472 = vdwg.mxu0
    %v473 = vld [vmem:[%s1 + $0x180] sm:$0xff]
    %v474 = vld [vmem:[%s1 + $0x188] sm:$0xff]
    %v475 = vld [vmem:[%s1 + $0x190] sm:$0xff]
    %v476 = vld [vmem:[%s1 + $0x198] sm:$0xff]
    %v477 = vld [vmem:[%s1 + $0x1a0] sm:$0xff]
    %v478 = vld [vmem:[%s1 + $0x1a8] sm:$0xff]
    %v479 = vld [vmem:[%s1 + $0x1b0] sm:$0xff]
    %v480 = vld [vmem:[%s1 + $0x1b8] sm:$0xff]
    %v481 = vld [vmem:[%s1 + $0x1c0] sm:$0xff]
    %v482 = vld [vmem:[%s1 + $0x1c8] sm:$0xff]
    %v483 = vld [vmem:[%s1 + $0x1d0] sm:$0xff]
    %v484 = vld [vmem:[%s1 + $0x1d8] sm:$0xff]
    %v485 = vld [vmem:[%s1 + $0x1e0] sm:$0xff]
    %v486 = vld [vmem:[%s1 + $0x1e8] sm:$0xff]
    %v487 = vld [vmem:[%s1 + $0x1f0] sm:$0xff]
    %v488 = vld [vmem:[%s1 + $0x1f8] sm:$0xff]
    %v489 = vunpack.c.l.bf16 %v473
    %v490 = vunpack.c.h.bf16 %v473
    %v491 = vunpack.c.l.bf16 %v474
    %v492 = vunpack.c.h.bf16 %v474
    %v493 = vunpack.c.l.bf16 %v475
    %v494 = vunpack.c.h.bf16 %v475
    %v495 = vunpack.c.l.bf16 %v476
    %v496 = vunpack.c.h.bf16 %v476
    %v497 = vunpack.c.l.bf16 %v477
    %v498 = vunpack.c.h.bf16 %v477
    %v499 = vunpack.c.l.bf16 %v478
    %v500 = vunpack.c.h.bf16 %v478
    %v501 = vunpack.c.l.bf16 %v479
    %v502 = vunpack.c.h.bf16 %v479
    %v503 = vunpack.c.l.bf16 %v480
    %v504 = vunpack.c.h.bf16 %v480
    %v505 = vunpack.c.l.bf16 %v481
    %v506 = vunpack.c.h.bf16 %v481
    %v507 = vunpack.c.l.bf16 %v482
    %v508 = vunpack.c.h.bf16 %v482
    %v509 = vunpack.c.l.bf16 %v483
    %v510 = vunpack.c.h.bf16 %v483
    %v511 = vunpack.c.l.bf16 %v484
    %v512 = vunpack.c.h.bf16 %v484
    %v513 = vunpack.c.l.bf16 %v485
    %v514 = vunpack.c.h.bf16 %v485
    %v515 = vunpack.c.l.bf16 %v486
    %v516 = vunpack.c.h.bf16 %v486
    %v517 = vunpack.c.l.bf16 %v487
    %v518 = vunpack.c.h.bf16 %v487
    %v519 = vunpack.c.l.bf16 %v488
    %v520 = vunpack.c.h.bf16 %v488
    %v521 = vld [vmem:[%s2 + $0x11] ss:$0 sm:$0xff]
    %522 = vmatpush.xpose.msra.mxu0 %v519
    %523 = vmatpush.xpose.msra.mxu0 %v517
    %524 = vmatpush.xpose.msra.mxu0 %v515
    %525 = vmatpush.xpose.msra.mxu0 %v513
    %526 = vmatpush.xpose.msra.mxu0 %v511
    %527 = vmatpush.xpose.msra.mxu0 %v509
    %528 = vmatpush.xpose.msra.mxu0 %v507
    %529 = vmatpush.xpose.msra.mxu0 %v505
    %530 = vmatpush.xpose.msra.mxu0 %v503
    %531 = vmatpush.xpose.msra.mxu0 %v501
    %532 = vmatpush.xpose.msra.mxu0 %v499
    %533 = vmatpush.xpose.msra.mxu0 %v497
    %534 = vmatpush.xpose.msra.mxu0 %v495
    %535 = vmatpush.xpose.msra.mxu0 %v493
    %536 = vmatpush.xpose.msra.mxu0 %v491
    %537 = vmatpush.xpose.msra.mxu0 %v489
    %538 = vmatmul.f32.gmra.mxu0 %v372
    %v539 = vpop.f32.mrf.mxu0
    %v540 = vadd.f32 %v521, %v539
    %541 = vdwg.mxu0
    %542 = vmatpush.xpose.msra.mxu0 %v520
    %543 = vmatpush.xpose.msra.mxu0 %v518
    %544 = vmatpush.xpose.msra.mxu0 %v516
    %545 = vmatpush.xpose.msra.mxu0 %v514
    %546 = vmatpush.xpose.msra.mxu0 %v512
    %547 = vmatpush.xpose.msra.mxu0 %v510
    %548 = vmatpush.xpose.msra.mxu0 %v508
    %549 = vmatpush.xpose.msra.mxu0 %v506
    %550 = vmatpush.xpose.msra.mxu0 %v504
    %551 = vmatpush.xpose.msra.mxu0 %v502
    %552 = vmatpush.xpose.msra.mxu0 %v500
    %553 = vmatpush.xpose.msra.mxu0 %v498
    %554 = vmatpush.xpose.msra.mxu0 %v496
    %555 = vmatpush.xpose.msra.mxu0 %v494
    %556 = vmatpush.xpose.msra.mxu0 %v492
    %557 = vmatpush.xpose.msra.mxu0 %v490
    %558 = vmatmul.f32.gmra.mxu0 %v412
    %v559 = vpop.f32.mrf.mxu0
    %v560 = vadd.f32 %v540, %v559
    %561 = vdwg.mxu0
    %v562 = vld [vmem:[%s2 + $0x12] ss:$0 sm:$0xff]
    %v563 = vld [vmem:[%s2 + $0x13] ss:$0 sm:$0xff]
    %v564 = vmul.f32 %v560, %v429
    %v565 = vrot.slane %v564, 4
    %v566 = vadd.f32 %v564, %v565
    %v567 = vrot.slane %v566, 2
    %v568 = vadd.f32 %v566, %v567
    %v569 = vrot.slane %v568, 1
    %v570 = vadd.f32 %v568, %v569
    %v571 = vmul.f32 %v570, 0.16666667
    %v572 = vsub.f32 %v560, %v571
    %v573 = vmul.f32 %v572, %v572
    %v574 = vmul.f32 %v573, %v429
    %v575 = vrot.slane %v574, 4
    %v576 = vadd.f32 %v574, %v575
    %v577 = vrot.slane %v576, 2
    %v578 = vadd.f32 %v576, %v577
    %v579 = vrot.slane %v578, 1
    %v580 = vadd.f32 %v578, %v579
    %v581 = vmul.f32 %v580, 0.16666667
    %v582 = vadd.f32 %v581, 1e-05
    %v583 = vrsqrt.pop %v582
    %v584 = vmul.f32 %v583, %v582
    %v585 = vmul.f32 %v584, %v583
    %v586 = vmul.f32 0.5, %v585
    %v587 = vsub.f32 1.5, %v586
    %v588 = vmul.f32 %v583, %v587
    %vm589 = vweird.f32 %v582
    %vm590 = vweird.f32 %v583
    %vm591 = vmor %vm589, %vm590
    %v592 = vsel %vm591, %v583, %v588
    %v593 = vmul.f32 %v572, %v592
    %v594 = vmul.f32 %v593, %v562
    %v595 = vadd.f32 %v594, %v563
    %v596 = vmax.f32 %v595, 0.0
    %v597 = vld [vmem:[%s1 + $0x200] sm:$0xff]
    %v598 = vld [vmem:[%s1 + $0x208] sm:$0xff]
    %v599 = vld [vmem:[%s1 + $0x210] sm:$0xff]
    %v600 = vld [vmem:[%s1 + $0x218] sm:$0xff]
    %v601 = vld [vmem:[%s1 + $0x220] sm:$0xff]
    %v602 = vld [vmem:[%s1 + $0x228] sm:$0xff]
    %v603 = vld [vmem:[%s1 + $0x230] sm:$0xff]
    %v604 = vld [vmem:[%s1 + $0x238] sm:$0xff]
    %v605 = vld [vmem:[%s1 + $0x240] sm:$0xff]
    %v606 = vld [vmem:[%s1 + $0x248] sm:$0xff]
    %v607 = vld [vmem:[%s1 + $0x250] sm:$0xff]
    %v608 = vld [vmem:[%s1 + $0x258] sm:$0xff]
    %v609 = vld [vmem:[%s1 + $0x260] sm:$0xff]
    %v610 = vld [vmem:[%s1 + $0x268] sm:$0xff]
    %v611 = vld [vmem:[%s1 + $0x270] sm:$0xff]
    %v612 = vld [vmem:[%s1 + $0x278] sm:$0xff]
    %v613 = vunpack.c.l.bf16 %v597
    %v614 = vunpack.c.h.bf16 %v597
    %v615 = vunpack.c.l.bf16 %v598
    %v616 = vunpack.c.h.bf16 %v598
    %v617 = vunpack.c.l.bf16 %v599
    %v618 = vunpack.c.h.bf16 %v599
    %v619 = vunpack.c.l.bf16 %v600
    %v620 = vunpack.c.h.bf16 %v600
    %v621 = vunpack.c.l.bf16 %v601
    %v622 = vunpack.c.h.bf16 %v601
    %v623 = vunpack.c.l.bf16 %v602
    %v624 = vunpack.c.h.bf16 %v602
    %v625 = vunpack.c.l.bf16 %v603
    %v626 = vunpack.c.h.bf16 %v603
    %v627 = vunpack.c.l.bf16 %v604
    %v628 = vunpack.c.h.bf16 %v604
    %v629 = vunpack.c.l.bf16 %v605
    %v630 = vunpack.c.h.bf16 %v605
    %v631 = vunpack.c.l.bf16 %v606
    %v632 = vunpack.c.h.bf16 %v606
    %v633 = vunpack.c.l.bf16 %v607
    %v634 = vunpack.c.h.bf16 %v607
    %v635 = vunpack.c.l.bf16 %v608
    %v636 = vunpack.c.h.bf16 %v608
    %v637 = vunpack.c.l.bf16 %v609
    %v638 = vunpack.c.h.bf16 %v609
    %v639 = vunpack.c.l.bf16 %v610
    %v640 = vunpack.c.h.bf16 %v610
    %v641 = vunpack.c.l.bf16 %v611
    %v642 = vunpack.c.h.bf16 %v611
    %v643 = vunpack.c.l.bf16 %v612
    %v644 = vunpack.c.h.bf16 %v612
    %s645 = scalar_lea.vmem %s2, 20
    %v646 = vld [vmem:[%s645] ss:$8 sm:$0x3]
    %v648 = vperm.slane %v646, 0
    %v649 = vperm.slane %v646, 1
    %652 = vmatpush.msra.mxu0 %v643
    %653 = vmatpush.msra.mxu0 %v641
    %654 = vmatpush.msra.mxu0 %v639
    %655 = vmatpush.msra.mxu0 %v637
    %656 = vmatpush.msra.mxu0 %v635
    %657 = vmatpush.msra.mxu0 %v633
    %658 = vmatpush.msra.mxu0 %v631
    %659 = vmatpush.msra.mxu0 %v629
    %660 = vmatpush.msra.mxu0 %v627
    %661 = vmatpush.msra.mxu0 %v625
    %662 = vmatpush.msra.mxu0 %v623
    %663 = vmatpush.msra.mxu0 %v621
    %664 = vmatpush.msra.mxu0 %v619
    %665 = vmatpush.msra.mxu0 %v617
    %666 = vmatpush.msra.mxu0 %v615
    %667 = vmatpush.msra.mxu0 %v613
    %668 = vmatmul.f32.gmra.mxu0 %v596
    %v669 = vpop.f32.mrf.mxu0
    %v670 = vadd.f32 %v648, %v669
    %671 = vdwg.mxu0
    %672 = vmatpush.msra.mxu0 %v644
    %673 = vmatpush.msra.mxu0 %v642
    %674 = vmatpush.msra.mxu0 %v640
    %675 = vmatpush.msra.mxu0 %v638
    %676 = vmatpush.msra.mxu0 %v636
    %677 = vmatpush.msra.mxu0 %v634
    %678 = vmatpush.msra.mxu0 %v632
    %679 = vmatpush.msra.mxu0 %v630
    %680 = vmatpush.msra.mxu0 %v628
    %681 = vmatpush.msra.mxu0 %v626
    %682 = vmatpush.msra.mxu0 %v624
    %683 = vmatpush.msra.mxu0 %v622
    %684 = vmatpush.msra.mxu0 %v620
    %685 = vmatpush.msra.mxu0 %v618
    %686 = vmatpush.msra.mxu0 %v616
    %687 = vmatpush.msra.mxu0 %v614
    %688 = vmatmul.f32.gmra.mxu0 %v596
    %v689 = vpop.f32.mrf.mxu0
    %v690 = vadd.f32 %v649, %v689
    %691 = vdwg.mxu0
    %v692 = vadd.f32 %v670, %v372
    %v693 = vadd.f32 %v690, %v412
    %v694 = vsub.f32 %v692, %v451
    %v695 = vsub.f32 %v693, %v471
    %v696 = vmul.f32 %v694, %v429
    %v697 = vmul.f32 %v695, %v429
    %v698 = vmul.f32 %v696, %v696
    %v699 = vmul.f32 %v697, %v697
    %v700 = vadd.f32 %v698, %v699
    %701 = vadd.xlane.f32.xlu0 %v700
    %v702 = vpop.xlane.xlu0 %701
    %v703 = vrot.slane %v702, 4
    %v704 = vadd.f32 %v702, %v703
    %v705 = vrot.slane %v704, 2
    %v706 = vadd.f32 %v704, %v705
    %v707 = vrot.slane %v706, 1
    %v708 = vadd.f32 %v706, %v707
    %s709 = vtos %v708
    %s710 = smul.f32 %s709, 0.0006510417
    %v711 = vrot.slane %v372, 4
    %v712 = vadd.f32 %v372, %v711
    %v713 = vrot.slane %v712, 2
    %v714 = vadd.f32 %v712, %v713
    %v715 = vrot.slane %v714, 1
    %v716 = vadd.f32 %v714, %v715
    %v717 = vrot.slane %v412, 4
    %v718 = vadd.f32 %v412, %v717
    %v719 = vrot.slane %v718, 2
    %v720 = vadd.f32 %v718, %v719
    %v721 = vrot.slane %v720, 1
    %v722 = vadd.f32 %v720, %v721
    %v723 = vmul.f32 %v716, %v170
    %v724 = vmul.f32 %v722, %v170
    %v725 = vsub.f32 %v372, %v723
    %v726 = vsub.f32 %v412, %v724
    %v727 = vmul.f32 %v725, %v725
    %v728 = vmul.f32 %v726, %v726
    %v729 = vrot.slane %v727, 4
    %v730 = vadd.f32 %v727, %v729
    %v731 = vrot.slane %v730, 2
    %v732 = vadd.f32 %v730, %v731
    %v733 = vrot.slane %v732, 1
    %v734 = vadd.f32 %v732, %v733
    %v735 = vrot.slane %v728, 4
    %v736 = vadd.f32 %v728, %v735
    %v737 = vrot.slane %v736, 2
    %v738 = vadd.f32 %v736, %v737
    %v739 = vrot.slane %v738, 1
    %v740 = vadd.f32 %v738, %v739
    %v741 = vmul.f32 %v734, 0.14285715
    %v742 = vmul.f32 %v740, 0.14285715
    %v743 = vadd.f32 %v741, 0.0001
    %v744 = vadd.f32 %v742, 0.0001
    %v745 = vrsqrt.pop %v743
    %v746 = vmul.f32 %v745, %v743
    %v747 = vmul.f32 %v746, %v745
    %v748 = vmul.f32 0.5, %v747
    %v749 = vsub.f32 1.5, %v748
    %v750 = vmul.f32 %v745, %v749
    %v751 = vmul.f32 %v743, %v750
    %vm752 = vcmp.eq.f32.partialorder %v743, inf
    %v753 = vsel %vm752, %v743, %v751
    %vm754 = vcmp.eq.f32.partialorder %v743, 0.0
    %v755 = vand.u32 %v743, 2147483648
    %v756 = vsel %vm754, %v755, %v753
    %v757 = vrsqrt.pop %v744
    %v758 = vmul.f32 %v757, %v744
    %v759 = vmul.f32 %v758, %v757
    %v760 = vmul.f32 0.5, %v759
    %v761 = vsub.f32 1.5, %v760
    %v762 = vmul.f32 %v757, %v761
    %v763 = vmul.f32 %v744, %v762
    %vm764 = vcmp.eq.f32.partialorder %v744, inf
    %v765 = vsel %vm764, %v744, %v763
    %vm766 = vcmp.eq.f32.partialorder %v744, 0.0
    %v767 = vand.u32 %v744, 2147483648
    %v768 = vsel %vm766, %v767, %v765
    %v769 = vsub.f32 1.0, %v756
    %v770 = vsub.f32 1.0, %v768
    %v771 = vmax.f32 %v769, 0.0
    %v772 = vmax.f32 %v770, 0.0
    %vm773 = vcmask 1040384
    %v774 = vsel %vm773, %v771, 0.0
    %v775 = vsel %vm773, %v772, 0.0
    %v776 = vadd.f32 %v774, %v775
    %777 = vadd.xlane.f32.xlu0 %v776
    %v778 = vpop.xlane.xlu0 %777
    %v779 = vrot.slane %v778, 4
    %v780 = vadd.f32 %v778, %v779
    %v781 = vrot.slane %v780, 2
    %v782 = vadd.f32 %v780, %v781
    %v783 = vrot.slane %v782, 1
    %v784 = vadd.f32 %v782, %v783
    %s785 = vtos %v784
    %v786 = vrcp.pop 256.0
    %v787 = vmul.f32 256.0, %v786
    %v788 = vsub.f32 1.0, %v787
    %v789 = vmul.f32 %v786, %v788
    %v790 = vadd.f32 %v786, %v789
    %vm791 = vweird.f32 %v786
    %v792 = vsel %vm791, %v786, %v790
    %s793 = vtos %v792
    %s794 = smul.f32 %s785, %s793
    %795 = vmatpush.xpose.msra.mxu0 0.0
    %796 = vmatpush.xpose.msra.mxu0 0.0
    %797 = vmatpush.xpose.msra.mxu0 0.0
    %798 = vmatpush.xpose.msra.mxu0 0.0
    %799 = vmatpush.xpose.msra.mxu0 0.0
    %800 = vmatpush.xpose.msra.mxu0 0.0
    %801 = vmatpush.xpose.msra.mxu0 0.0
    %802 = vmatpush.xpose.msra.mxu0 0.0
    %803 = vmatpush.xpose.msra.mxu0 0.0
    %804 = vmatpush.xpose.msra.mxu0 0.0
    %805 = vmatpush.xpose.msra.mxu0 0.0
    %806 = vmatpush.xpose.msra.mxu0 0.0
    %807 = vmatpush.xpose.msra.mxu0 0.0
    %808 = vmatpush.xpose.msra.mxu0 0.0
    %809 = vmatpush.xpose.msra.mxu0 0.0
    %810 = vmatpush.xpose.msra.mxu0 %v725
    %811 = vmatmul.f32.gmra.mxu0 %v725
    %v812 = vpop.f32.mrf.mxu0
    %v813 = vadd.f32 0.0, %v812
    %814 = vdwg.mxu0
    %815 = vmatpush.xpose.msra.mxu0 0.0
    %816 = vmatpush.xpose.msra.mxu0 0.0
    %817 = vmatpush.xpose.msra.mxu0 0.0
    %818 = vmatpush.xpose.msra.mxu0 0.0
    %819 = vmatpush.xpose.msra.mxu0 0.0
    %820 = vmatpush.xpose.msra.mxu0 0.0
    %821 = vmatpush.xpose.msra.mxu0 0.0
    %822 = vmatpush.xpose.msra.mxu0 0.0
    %823 = vmatpush.xpose.msra.mxu0 0.0
    %824 = vmatpush.xpose.msra.mxu0 0.0
    %825 = vmatpush.xpose.msra.mxu0 0.0
    %826 = vmatpush.xpose.msra.mxu0 0.0
    %827 = vmatpush.xpose.msra.mxu0 0.0
    %828 = vmatpush.xpose.msra.mxu0 0.0
    %829 = vmatpush.xpose.msra.mxu0 0.0
    %830 = vmatpush.xpose.msra.mxu0 %v726
    %831 = vmatmul.f32.gmra.mxu0 %v726
    %v832 = vpop.f32.mrf.mxu0
    %v833 = vadd.f32 %v813, %v832
    %834 = vdwg.mxu0
    %v835 = vmul.f32 %v833, %v833
    %v836 = vsel %vm426, %v835, 0.0
    %837 = vadd.xlane.f32.xlu0 %v836
    %v838 = vpop.xlane.xlu0 %837
    %v839 = vrot.slane %v838, 4
    %v840 = vadd.f32 %v838, %v839
    %v841 = vrot.slane %v840, 2
    %v842 = vadd.f32 %v840, %v841
    %v843 = vrot.slane %v842, 1
    %v844 = vadd.f32 %v842, %v843
    %s845 = vtos %v844
    %s846 = smul.f32 %s845, 0.020408163
    %v847 = vmul.f32 %v741, %v741
    %v848 = vmul.f32 %v742, %v742
    %v849 = vsel %vm773, %v847, 0.0
    %v850 = vsel %vm773, %v848, 0.0
    %v851 = vadd.f32 %v849, %v850
    %852 = vadd.xlane.f32.xlu0 %v851
    %v853 = vpop.xlane.xlu0 %852
    %v854 = vrot.slane %v853, 4
    %v855 = vadd.f32 %v853, %v854
    %v856 = vrot.slane %v855, 2
    %v857 = vadd.f32 %v855, %v856
    %v858 = vrot.slane %v857, 1
    %v859 = vadd.f32 %v857, %v858
    %s860 = vtos %v859
    %s861 = ssub.f32 %s846, %s860
    %s862 = smul.f32 %s861, 0.00390625
    %s863 = sadd.f32 %s710, 0.0
    %s864 = sadd.f32 %s863, %s794
    %s865 = smul.f32 %s862, 0.04
    %s866 = sadd.f32 %s864, %s865
    %s867 = scalar_lea.smem [#allocation2], 0
    %868 = sst [smem:[%s867]] %s866
    // Predicated region
    $region14: #{pcnet_forward.1} parent=1 // pred_check
      _
    $region15: #{pcnet_forward.1} parent=1 // pred_check_branch
      %870 = sbr.rel (0) target = $region17
    $region16: #{pcnet_forward.1} parent=1 // pred_region
      %872 = vsyncadd [#allocation3], 0
      %s874 = sshll.u32 %s3, 4
      %s875 = int_to_ptr.hbm [resolvable:$true] %s874
      %877 = dma.smem_to_hbm [#allocation2], 16, %s875, [#allocation3]
    $region17: #{pcnet_forward.1} parent=1 // pred_fallthru
      _
    // Predicated region
    $region18: #{pcnet_forward.1} parent=1 // pred_check
      _
    $region19: #{pcnet_forward.1} parent=1 // pred_check_branch
      %879 = sbr.rel (0) target = $region21
    $region20: #{pcnet_forward.1} parent=1 // pred_region
      %881 = dma.done [#allocation3], 16
    $region21: #{pcnet_forward.1} parent=1 // pred_fallthru
      _
    %882 = sfence
    %883 = vsyncpa [#allocation3], 1

</llo_original>
